<compile_context>
chip_gen: v6e
topology: v6e:2x2x1
jax: 0.10.0
libtpu: 0.0.40
codegen_flags: <defaults>
</compile_context>

<pallas_src>
import jax
import jax.numpy as jnp
from jax.experimental import pallas as pl
from jax.experimental.pallas import tpu as pltpu


def mlp_kernel(x_ref, w1_ref, b1_ref, w2_ref, b2_ref, w3_ref, b3_ref, o_ref):
    # fc1: bf16 MXU matmul, f32 accumulate; bias add + ReLU on the VPU in f32.
    h1 = jnp.dot(x_ref[...], w1_ref[...], preferred_element_type=jnp.float32)
    h1 = jnp.maximum(h1 + b1_ref[...], 0.0)                      # (TB, 64) f32

    # fc2: same bf16-in / f32-accum pattern.
    h2 = jnp.dot(h1.astype(jnp.bfloat16), w2_ref[...],
                 preferred_element_type=jnp.float32)
    h2 = jnp.maximum(h2 + b2_ref[...], 0.0)                      # (TB, 32) f32

    # fc3 (out_features == 1): VPU multiply + lane reduce instead of an MXU
    # matmul that would use a single output column.
    h3 = jnp.sum(h2 * w3_ref[...], axis=-1, keepdims=True) + b3_ref[...]
    o_ref[...] = jax.nn.sigmoid(h3).astype(o_ref.dtype)          # (TB, 1)
    # TODO(synk): for very large B a lane-dense (B/128, 128) output layout
    # would avoid masked vst.msk stores; output bytes are ~3% of input bytes
    # so the (TB, 1) block is kept for simplicity.


def _round_up(n, m):
    return ((n + m - 1) // m) * m


def mlp_forward(x, w1, b1, w2, b2, w3, b3, *, max_tile_b=1024):
    B, D = x.shape

    # Large batch tile (amortizes ~0.35 us/step overhead), multiple of 8 sublanes.
    tile_b = min(max_tile_b, _round_up(B, 8))
    b_pad = _round_up(B, tile_b)
    if b_pad != B:
        x = jnp.pad(x, ((0, b_pad - B), (0, 0)))

    # MXU-feeding tensors in bf16; elementwise math / accumulators stay f32.
    x_bf = x.astype(jnp.bfloat16)
    w1_bf = w1.astype(jnp.bfloat16)
    w2_bf = w2.astype(jnp.bfloat16)
    b1_2d = b1.reshape(1, -1).astype(jnp.float32)     # (1, 64)
    b2_2d = b2.reshape(1, -1).astype(jnp.float32)     # (1, 32)
    w3_row = w3.reshape(1, -1).astype(jnp.float32)    # (1, 32), used on the VPU
    b3_2d = b3.reshape(1, -1).astype(jnp.float32)     # (1, 1)

    grid = (b_pad // tile_b,)

    def const(a):
        # Whole array as one block, same block for every grid step -> weights
        # stay resident in VMEM (single DMA).
        return pl.BlockSpec(a.shape, lambda i: (0,) * a.ndim)

    out = pl.pallas_call(
        mlp_kernel,
        out_shape=jax.ShapeDtypeStruct((b_pad, 1), jnp.float32),
        grid=grid,
        in_specs=[
            pl.BlockSpec((tile_b, D), lambda i: (i, 0)),   # x: tiled over batch
            const(w1_bf), const(b1_2d),
            const(w2_bf), const(b2_2d),
            const(w3_row), const(b3_2d),
        ],
        out_specs=pl.BlockSpec((tile_b, 1), lambda i: (i, 0)),
        compiler_params=pltpu.CompilerParams(
            dimension_semantics=("parallel",)),            # 2-TC sharding on v7x
    )(x_bf, w1_bf, b1_2d, w2_bf, b2_2d, w3_row, b3_2d)

    return out[:B]


def init_params(key, input_size):
    # Deterministic init mimicking torch.nn.Linear default:
    # U(-1/sqrt(fan_in), 1/sqrt(fan_in)) for both weight and bias.
    def linear(key, fan_in, fan_out):
        kw, kb = jax.random.split(key)
        bound = 1.0 / jnp.sqrt(fan_in)
        w = jax.random.uniform(kw, (fan_in, fan_out), jnp.float32, -bound, bound)
        b = jax.random.uniform(kb, (fan_out,), jnp.float32, -bound, bound)
        return w, b

    k1, k2, k3 = jax.random.split(key, 3)
    w1, b1 = linear(k1, input_size, 64)
    w2, b2 = linear(k2, 64, 32)
    w3, b3 = linear(k3, 32, 1)
    return w1, b1, w2, b2, w3, b3


if __name__ == "__main__":
    input_size = 32
    batch = 8

    key = jax.random.PRNGKey(0)
    kx, kp = jax.random.split(key)
    x = jax.random.normal(kx, (batch, input_size), jnp.float32)
    params = init_params(kp, input_size)

    out = mlp_forward(x, *params)
    jax.block_until_ready(out)
    assert out.shape == (batch, 1)

    w1, b1, w2, b2, w3, b3 = params

    # Reference 1: same bf16-input / f32-accum math as the kernel (tight tol).
    r1 = jnp.maximum(
        jnp.dot(x.astype(jnp.bfloat16), w1.astype(jnp.bfloat16),
                preferred_element_type=jnp.float32) + b1, 0.0)
    r2 = jnp.maximum(
        jnp.dot(r1.astype(jnp.bfloat16), w2.astype(jnp.bfloat16),
                preferred_element_type=jnp.float32) + b2, 0.0)
    ref_bf16 = jax.nn.sigmoid(r2 @ w3 + b3)
    assert jnp.allclose(out, ref_bf16, atol=2e-3, rtol=2e-3)

    # Reference 2: pure f32 torch-equivalent forward (loose tol for bf16 matmuls).
    f1 = jnp.maximum(x @ w1 + b1, 0.0)
    f2 = jnp.maximum(f1 @ w2 + b2, 0.0)
    ref_f32 = jax.nn.sigmoid(f2 @ w3 + b3)
    assert jnp.allclose(out, ref_f32, atol=3e-2, rtol=3e-2)

    print("KERNEL_OK")
</pallas_src>

<mosaic_0001>
module attributes {stable_mosaic.version = 11 : i64} {
  func.func @mlp_kernel(%arg0: i32, %arg1: memref<8x32xbf16, #tpu.memory_space<vmem>>, %arg2: memref<32x64xbf16, #tpu.memory_space<vmem>>, %arg3: memref<1x64xf32, #tpu.memory_space<vmem>>, %arg4: memref<64x32xbf16, #tpu.memory_space<vmem>>, %arg5: memref<1x32xf32, #tpu.memory_space<vmem>>, %arg6: memref<1x32xf32, #tpu.memory_space<vmem>>, %arg7: memref<1x1xf32, #tpu.memory_space<vmem>>, %arg8: memref<8x1xf32, #tpu.memory_space<vmem>>) attributes {dimension_semantics = [#tpu.dimension_semantics<parallel>], iteration_bounds = array<i64: 1>, scalar_prefetch = 0 : i64, scratch_operands = 0 : i64, tpu.core_type = #tpu.core_type<tc>, window_params = [{transform_indices = @transform_0, window_bounds = array<i64: 8, 32>}, {pipeline_mode = #tpu.pipeline_mode<synchronous>, transform_indices = @transform_1, window_bounds = array<i64: 32, 64>}, {pipeline_mode = #tpu.pipeline_mode<synchronous>, transform_indices = @transform_2, window_bounds = array<i64: 1, 64>}, {pipeline_mode = #tpu.pipeline_mode<synchronous>, transform_indices = @transform_3, window_bounds = array<i64: 64, 32>}, {pipeline_mode = #tpu.pipeline_mode<synchronous>, transform_indices = @transform_4, window_bounds = array<i64: 1, 32>}, {pipeline_mode = #tpu.pipeline_mode<synchronous>, transform_indices = @transform_5, window_bounds = array<i64: 1, 32>}, {pipeline_mode = #tpu.pipeline_mode<synchronous>, transform_indices = @transform_6, window_bounds = array<i64: 1, 1>}, {transform_indices = @transform_7, window_bounds = array<i64: 8, 1>}]} {
    %c0 = arith.constant 0 : index
    %c0_0 = arith.constant 0 : index
    %0 = vector.load %arg1[%c0, %c0_0] : memref<8x32xbf16, #tpu.memory_space<vmem>>, vector<8x32xbf16>
    %c0_1 = arith.constant 0 : index
    %c0_2 = arith.constant 0 : index
    %1 = vector.load %arg2[%c0_1, %c0_2] : memref<32x64xbf16, #tpu.memory_space<vmem>>, vector<32x64xbf16>
    %cst = arith.constant dense<0.000000e+00> : vector<8x64xf32>
    %2 = tpu.matmul %0, %1, %cst {dimension_numbers = #tpu.dot_dimension_numbers<[1], [0], [0], [1], [0, 0, 1, 1], [], []>} : vector<8x32xbf16>, vector<32x64xbf16>, vector<8x64xf32> -> vector<8x64xf32>
    %c0_3 = arith.constant 0 : index
    %c0_4 = arith.constant 0 : index
    %3 = vector.load %arg3[%c0_3, %c0_4] : memref<1x64xf32, #tpu.memory_space<vmem>>, vector<1x64xf32>
    %4 = vector.broadcast %3 : vector<1x64xf32> to vector<8x64xf32>
    %5 = arith.addf %2, %4 : vector<8x64xf32>
    %cst_5 = arith.constant 0.000000e+00 : f32
    %6 = vector.broadcast %cst_5 : f32 to vector<8x64xf32>
    %7 = arith.maximumf %5, %6 : vector<8x64xf32>
    %8 = arith.truncf %7 : vector<8x64xf32> to vector<8x64xbf16>
    %c0_6 = arith.constant 0 : index
    %c0_7 = arith.constant 0 : index
    %9 = vector.load %arg4[%c0_6, %c0_7] : memref<64x32xbf16, #tpu.memory_space<vmem>>, vector<64x32xbf16>
    %cst_8 = arith.constant dense<0.000000e+00> : vector<8x32xf32>
    %10 = tpu.matmul %8, %9, %cst_8 {dimension_numbers = #tpu.dot_dimension_numbers<[1], [0], [0], [1], [0, 0, 1, 1], [], []>} : vector<8x64xbf16>, vector<64x32xbf16>, vector<8x32xf32> -> vector<8x32xf32>
    %c0_9 = arith.constant 0 : index
    %c0_10 = arith.constant 0 : index
    %11 = vector.load %arg5[%c0_9, %c0_10] : memref<1x32xf32, #tpu.memory_space<vmem>>, vector<1x32xf32>
    %12 = vector.broadcast %11 : vector<1x32xf32> to vector<8x32xf32>
    %13 = arith.addf %10, %12 : vector<8x32xf32>
    %cst_11 = arith.constant 0.000000e+00 : f32
    %14 = vector.broadcast %cst_11 : f32 to vector<8x32xf32>
    %15 = arith.maximumf %13, %14 : vector<8x32xf32>
    %c0_12 = arith.constant 0 : index
    %c0_13 = arith.constant 0 : index
    %16 = vector.load %arg6[%c0_12, %c0_13] : memref<1x32xf32, #tpu.memory_space<vmem>>, vector<1x32xf32>
    %17 = vector.broadcast %16 : vector<1x32xf32> to vector<8x32xf32>
    %18 = arith.mulf %15, %17 : vector<8x32xf32>
    %cst_14 = arith.constant dense<0.000000e+00> : vector<8xf32>
    %19 = vector.multi_reduction <add>, %18, %cst_14 [1] : vector<8x32xf32> to vector<8xf32>
    %20 = vector.shape_cast %19 : vector<8xf32> to vector<8x1xf32>
    %c0_15 = arith.constant 0 : index
    %c0_16 = arith.constant 0 : index
    %21 = vector.load %arg7[%c0_15, %c0_16] : memref<1x1xf32, #tpu.memory_space<vmem>>, vector<1x1xf32>
    %22 = vector.broadcast %21 : vector<1x1xf32> to vector<8x1xf32>
    %23 = arith.addf %20, %22 : vector<8x1xf32>
    %24 = arith.negf %23 : vector<8x1xf32>
    %25 = math.exp %24 : vector<8x1xf32>
    %cst_17 = arith.constant 1.000000e+00 : f32
    %26 = vector.broadcast %cst_17 : f32 to vector<8x1xf32>
    %27 = arith.addf %26, %25 : vector<8x1xf32>
    %28 = arith.divf %26, %27 : vector<8x1xf32>
    %c0_18 = arith.constant 0 : index
    %c0_19 = arith.constant 0 : index
    %29 = vector.load %arg8[%c0_18, %c0_19] : memref<8x1xf32, #tpu.memory_space<vmem>>, vector<8x1xf32>
    tpu.vector_store %arg8[%c0_18, %c0_19], %28 {strides = array<i32>} : memref<8x1xf32, #tpu.memory_space<vmem>>, vector<8x1xf32>,
    return
  }
  func.func @transform_0(%arg0: i32) -> (i32, i32) {
    %c0_i32 = arith.constant 0 : i32
    %c0_i32_0 = arith.constant 0 : i32
    return %arg0, %c0_i32 : i32, i32
  }
  func.func @transform_1(%arg0: i32) -> (i32, i32) {
    %c0_i32 = arith.constant 0 : i32
    %c0_i32_0 = arith.constant 0 : i32
    %c0_i32_1 = arith.constant 0 : i32
    return %c0_i32, %c0_i32_0 : i32, i32
  }
  func.func @transform_2(%arg0: i32) -> (i32, i32) {
    %c0_i32 = arith.constant 0 : i32
    %c0_i32_0 = arith.constant 0 : i32
    %c0_i32_1 = arith.constant 0 : i32
    return %c0_i32, %c0_i32_0 : i32, i32
  }
  func.func @transform_3(%arg0: i32) -> (i32, i32) {
    %c0_i32 = arith.constant 0 : i32
    %c0_i32_0 = arith.constant 0 : i32
    %c0_i32_1 = arith.constant 0 : i32
    return %c0_i32, %c0_i32_0 : i32, i32
  }
  func.func @transform_4(%arg0: i32) -> (i32, i32) {
    %c0_i32 = arith.constant 0 : i32
    %c0_i32_0 = arith.constant 0 : i32
    %c0_i32_1 = arith.constant 0 : i32
    return %c0_i32, %c0_i32_0 : i32, i32
  }
  func.func @transform_5(%arg0: i32) -> (i32, i32) {
    %c0_i32 = arith.constant 0 : i32
    %c0_i32_0 = arith.constant 0 : i32
    %c0_i32_1 = arith.constant 0 : i32
    return %c0_i32, %c0_i32_0 : i32, i32
  }
  func.func @transform_6(%arg0: i32) -> (i32, i32) {
    %c0_i32 = arith.constant 0 : i32
    %c0_i32_0 = arith.constant 0 : i32
    %c0_i32_1 = arith.constant 0 : i32
    return %c0_i32, %c0_i32_0 : i32, i32
  }
  func.func @transform_7(%arg0: i32) -> (i32, i32) {
    %c0_i32 = arith.constant 0 : i32
    %c0_i32_0 = arith.constant 0 : i32
    return %arg0, %c0_i32 : i32, i32
  }
}

</mosaic_0001>

<llo_original>
// kernel: tpu_custom_call.1
$region0: #{tpu_custom_call.1}
  #allocation0 [shape = 'u32[]', space=smem, size = 0x4, offset = 0x4, fixed_abs, tag = 'smem constant byte address 0x4 - core index']
  #allocation1 [shape = 'u32[144,128]{1,0:T(1,128)}', space=vmem, size = 0x12000, scoped, tag = 'internal scratch']
  #allocation2 [shape = 'f32[1,1]{1,0:T(1,128)S(1)}', space=vmem, size = 0x200, scoped, tag = 'scoped memory for tpu_custom_call.1']
  %s0 = inlined_call_operand.vmem [shape: bf16[8,32], index: 0, kind: input, shape index: {}]
  %s1 = inlined_call_operand.vmem [shape: bf16[32,64], index: 1, kind: input, shape index: {}]
  %s2 = inlined_call_operand.vmem [shape: f32[1,64], index: 2, kind: input, shape index: {}]
  %s3 = inlined_call_operand.vmem [shape: bf16[64,32], index: 3, kind: input, shape index: {}]
  %s4 = inlined_call_operand.vmem [shape: f32[1,32], index: 4, kind: input, shape index: {}]
  %s5 = inlined_call_operand.vmem [shape: f32[1,32], index: 5, kind: input, shape index: {}]
  %s6 = inlined_call_operand.<no memory space> [shape: f32[1,1], index: 6, kind: input, shape index: {}]
  %s7 = inlined_call_operand.vmem [shape: f32[8,1], index: 7, kind: output, shape index: {}]
  %s8 = sld [smem:[#allocation0]]
  $region38: #{tpu_custom_call.1} parent=0
    _
  %s10 = ssub.s32 1, %s8
  %s11 = scalar_select 0, %s10, %s8
  %v12 = vstv %s6
  %13 = vst [vmem:[#allocation2] sm:$0x1] %v12
  // Predicated region
  $region2: #{tpu_custom_call.1} parent=0 // pred_check
    _
  $region3: #{tpu_custom_call.1} parent=0 // pred_check_branch
    %15 = sbr.rel (0) target = $region5
  $region4: #{tpu_custom_call.1} parent=0 // pred_region
    _
  $region5: #{tpu_custom_call.1} parent=0 // pred_fallthru
    _
  // Predicated region
  $region6: #{tpu_custom_call.1} parent=0 // pred_check
    _
  $region7: #{tpu_custom_call.1} parent=0 // pred_check_branch
    %17 = sbr.rel (0) target = $region9
  $region8: #{tpu_custom_call.1} parent=0 // pred_region
    _
  $region9: #{tpu_custom_call.1} parent=0 // pred_fallthru
    _
  // Predicated region
  $region10: #{tpu_custom_call.1} parent=0 // pred_check
    _
  $region11: #{tpu_custom_call.1} parent=0 // pred_check_branch
    %19 = sbr.rel (0) target = $region13
  $region12: #{tpu_custom_call.1} parent=0 // pred_region
    _
  $region13: #{tpu_custom_call.1} parent=0 // pred_fallthru
    _
  // Predicated region
  $region14: #{tpu_custom_call.1} parent=0 // pred_check
    _
  $region15: #{tpu_custom_call.1} parent=0 // pred_check_branch
    %21 = sbr.rel (0) target = $region17
  $region16: #{tpu_custom_call.1} parent=0 // pred_region
    _
  $region17: #{tpu_custom_call.1} parent=0 // pred_fallthru
    _
  // Predicated region
  $region18: #{tpu_custom_call.1} parent=0 // pred_check
    _
  $region19: #{tpu_custom_call.1} parent=0 // pred_check_branch
    %23 = sbr.rel (0) target = $region21
  $region20: #{tpu_custom_call.1} parent=0 // pred_region
    _
  $region21: #{tpu_custom_call.1} parent=0 // pred_fallthru
    _
  // Predicated region
  $region22: #{tpu_custom_call.1} parent=0 // pred_check
    _
  $region23: #{tpu_custom_call.1} parent=0 // pred_check_branch
    %25 = sbr.rel (0) target = $region25
  $region24: #{tpu_custom_call.1} parent=0 // pred_region
    _
  $region25: #{tpu_custom_call.1} parent=0 // pred_fallthru
    _
  // Predicated region
  $region26: #{tpu_custom_call.1} parent=0 // pred_check
    _
  $region27: #{tpu_custom_call.1} parent=0 // pred_check_branch
    %27 = sbr.rel (0) target = $region29
  $region28: #{tpu_custom_call.1} parent=0 // pred_region
    _
  $region29: #{tpu_custom_call.1} parent=0 // pred_fallthru
    _
  %v29 = vld [vmem:[%s0] sm:$0xf]
  %v30 = vld [vmem:[%s1] sm:$0xf]
  %v31 = vld [vmem:[%s1 + $0x4] sm:$0xf]
  %v32 = vld [vmem:[%s1 + $0x8] sm:$0xf]
  %v33 = vld [vmem:[%s1 + $0xc] sm:$0xf]
  %v34 = vld [vmem:[%s2] sm:$0x1]
  %v36 = vlaneseq
  %v37 = vshrl.u32 %v36, 7
  %v38 = vsub.s32 0, %v37
  %v39 = vrot.slane %v34, %v38
  %v45 = vunpack.c.l.b16 %v30
  %v46 = vunpack.c.l.b16 %v31
  %v47 = vunpack.c.l.b16 %v32
  %v48 = vunpack.c.l.b16 %v33
  %v49 = vpack.c.b16 %v46, %v45
  %v50 = vpack.c.b16 %v48, %v47
  %vm53 = vcmask 261120
  %v55 = vsel %vm53, %v29, 0
  %57 = vmatprep.subr.bf16.mxu0 0
  %58 = vmatpush1.bf16.msra.mxu0 0
  %59 = vmatprep.subr.bf16.mxu0 0
  %60 = vmatpush1.bf16.msra.mxu0 0
  %61 = vmatprep.subr.bf16.mxu0 0
  %62 = vmatpush1.bf16.msra.mxu0 0
  %63 = vmatprep.subr.bf16.mxu0 0
  %64 = vmatpush1.bf16.msra.mxu0 0
  %65 = vmatprep.subr.bf16.mxu0 0
  %66 = vmatpush1.bf16.msra.mxu0 0
  %67 = vmatprep.subr.bf16.mxu0 0
  %68 = vmatpush1.bf16.msra.mxu0 0
  %69 = vmatprep.subr.bf16.mxu0 0
  %70 = vmatpush1.bf16.msra.mxu0 %v50
  %71 = vmatprep.subr.bf16.mxu0 0
  %72 = vmatpush1.bf16.msra.mxu0 %v49
  %73 = vmatprep.subr.bf16.mxu0 0
  %74 = vmatpush2.bf16.msra.mxu0 0
  %75 = vmatprep.subr.bf16.mxu0 0
  %76 = vmatpush2.bf16.msra.mxu0 0
  %77 = vmatprep.subr.bf16.mxu0 0
  %78 = vmatpush2.bf16.msra.mxu0 0
  %79 = vmatprep.subr.bf16.mxu0 0
  %80 = vmatpush2.bf16.msra.mxu0 0
  %81 = vmatprep.subr.bf16.mxu0 0
  %82 = vmatpush2.bf16.msra.mxu0 0
  %83 = vmatprep.subr.bf16.mxu0 0
  %84 = vmatpush2.bf16.msra.mxu0 0
  %85 = vmatprep.subr.bf16.mxu0 0
  %86 = vmatpush2.bf16.msra.mxu0 0
  %87 = vmatprep.subr.bf16.mxu0 0
  %88 = vmatpush2.bf16.msra.mxu0 0
  %89 = vmatprep.mubr.bf16.mxu0 0
  %90 = vmatmul.mubr.bf16.gmra.mxu0 %v55
  %v91 = vpop.f32.mrf.mxu0
  %v92 = vadd.f32 %v39, %v91
  %v93 = vpop.f32.mrf.mxu0
  %v94 = vpop.f32.mrf.mxu0
  %v95 = vpop.f32.mrf.mxu0
  %96 = vdwg.mxu0
  %v97 = vmax.f32 %v92, 0.0
  %v98 = vpack.c.bf16 %v97, %v97
  %v99 = vld [vmem:[%s3] sm:$0xf]
  %v100 = vld [vmem:[%s3 + $0x4] sm:$0xf]
  %v101 = vld [vmem:[%s3 + $0x8] sm:$0xf]
  %v102 = vld [vmem:[%s3 + $0xc] sm:$0xf]
  %v103 = vld [vmem:[%s3 + $0x10] sm:$0xf]
  %v104 = vld [vmem:[%s3 + $0x14] sm:$0xf]
  %v105 = vld [vmem:[%s3 + $0x18] sm:$0xf]
  %v106 = vld [vmem:[%s3 + $0x1c] sm:$0xf]
  %v107 = vld [vmem:[%s4] sm:$0x1]
  %v109 = vlaneseq
  %v110 = vshrl.u32 %v109, 7
  %v111 = vsub.s32 0, %v110
  %v112 = vrot.slane %v107, %v111
  %v122 = vunpack.c.l.b16 %v99
  %v123 = vunpack.c.l.b16 %v100
  %v124 = vunpack.c.l.b16 %v101
  %v125 = vunpack.c.l.b16 %v102
  %v126 = vunpack.c.l.b16 %v103
  %v127 = vunpack.c.l.b16 %v104
  %v128 = vunpack.c.l.b16 %v105
  %v129 = vunpack.c.l.b16 %v106
  %v130 = vpack.c.b16 %v123, %v122
  %v131 = vpack.c.b16 %v125, %v124
  %v132 = vpack.c.b16 %v127, %v126
  %v133 = vpack.c.b16 %v129, %v128
  %vm138 = vcmask 523264
  %v140 = vsel %vm138, %v98, 0
  %142 = vmatprep.subr.bf16.mxu0 0
  %143 = vmatpush1.bf16.msra.mxu0 0
  %144 = vmatprep.subr.bf16.mxu0 0
  %145 = vmatpush1.bf16.msra.mxu0 0
  %146 = vmatprep.subr.bf16.mxu0 0
  %147 = vmatpush1.bf16.msra.mxu0 0
  %148 = vmatprep.subr.bf16.mxu0 0
  %149 = vmatpush1.bf16.msra.mxu0 0
  %150 = vmatprep.subr.bf16.mxu0 0
  %151 = vmatpush1.bf16.msra.mxu0 %v133
  %152 = vmatprep.subr.bf16.mxu0 0
  %153 = vmatpush1.bf16.msra.mxu0 %v132
  %154 = vmatprep.subr.bf16.mxu0 0
  %155 = vmatpush1.bf16.msra.mxu0 %v131
  %156 = vmatprep.subr.bf16.mxu0 0
  %157 = vmatpush1.bf16.msra.mxu0 %v130
  %158 = vmatprep.subr.bf16.mxu0 0
  %159 = vmatpush2.bf16.msra.mxu0 0
  %160 = vmatprep.subr.bf16.mxu0 0
  %161 = vmatpush2.bf16.msra.mxu0 0
  %162 = vmatprep.subr.bf16.mxu0 0
  %163 = vmatpush2.bf16.msra.mxu0 0
  %164 = vmatprep.subr.bf16.mxu0 0
  %165 = vmatpush2.bf16.msra.mxu0 0
  %166 = vmatprep.subr.bf16.mxu0 0
  %167 = vmatpush2.bf16.msra.mxu0 0
  %168 = vmatprep.subr.bf16.mxu0 0
  %169 = vmatpush2.bf16.msra.mxu0 0
  %170 = vmatprep.subr.bf16.mxu0 0
  %171 = vmatpush2.bf16.msra.mxu0 0
  %172 = vmatprep.subr.bf16.mxu0 0
  %173 = vmatpush2.bf16.msra.mxu0 0
  %174 = vmatprep.mubr.bf16.mxu0 0
  %175 = vmatmul.mubr.bf16.gmra.mxu0 %v140
  %v176 = vpop.f32.mrf.mxu0
  %v177 = vadd.f32 %v112, %v176
  %v178 = vpop.f32.mrf.mxu0
  %v179 = vpop.f32.mrf.mxu0
  %v180 = vpop.f32.mrf.mxu0
  %181 = vdwg.mxu0
  %v182 = vmax.f32 %v177, 0.0
  %v183 = vld [vmem:[%s5] sm:$0x1]
  %v185 = vlaneseq
  %v186 = vshrl.u32 %v185, 7
  %v187 = vsub.s32 0, %v186
  %v188 = vrot.slane %v183, %v187
  %v190 = vmul.f32 %v182, %v188
  %v191 = vsel %vm53, %v190, 0.0
  %192 = vadd.xlane.f32.xlu0 %v191
  %v193 = vpop.xlane.xlu0 %192
  %v194 = vld [vmem:[#allocation2] sm:$0x1]
  %v196 = vlaneseq
  %v197 = vshrl.u32 %v196, 7
  %v198 = vsub.s32 0, %v197
  %v199 = vrot.slane %v194, %v198
  %v201 = vadd.f32 %v193, %v199
  %v202 = vxor.u32 %v201, 2147483648
  %v203 = vmul.f32 %v202, 1.442695
  %v204 = vpow.pop %v203
  %v205 = vadd.f32 %v204, 1.0
  %v206 = vrcp.pop %v205
  %v207 = vmul.f32 1.0, %v206
  %vm208 = vcmask 7168
  %209 = vst.msk [vmem:[%s7] sm:$0xff] %vm208, %v207
  // Predicated region
  $region30: #{tpu_custom_call.1} parent=0 // pred_check
    _
  $region31: #{tpu_custom_call.1} parent=0 // pred_check_branch
    %211 = sbr.rel (0) target = $region33
  $region32: #{tpu_custom_call.1} parent=0 // pred_region
    _
  $region33: #{tpu_custom_call.1} parent=0 // pred_fallthru
    _
  // Predicated region
  $region34: #{tpu_custom_call.1} parent=0 // pred_check
    _
  $region35: #{tpu_custom_call.1} parent=0 // pred_check_branch
    %213 = sbr.rel (0) target = $region37
  $region36: #{tpu_custom_call.1} parent=0 // pred_region
    _
  $region37: #{tpu_custom_call.1} parent=0 // pred_fallthru
    _

</llo_original>
